<compile_context>
chip_gen: v5e
topology: v5e:2x2
jax: 0.10.0
libtpu: 0.0.40
codegen_flags: <defaults>
</compile_context>

<pallas_src>
import jax
import jax.numpy as jnp
from jax import lax
from jax.experimental import pallas as pl
from jax.experimental.pallas import tpu as pltpu


def role2label_kernel(qp_ref, a_ref, bm_ref, w2_ref, out_ref):
    # qp_ref : (TB, R, H)  projected role features (q @ Wq^T + bq), batch tile
    # a_ref  : (TB, R, H)  query-side attention projection (qp @ W1v^T), batch tile
    # bm_ref : (TV, H)     label-side attention input (label @ W1l^T + b1), vocab tile
    # w2_ref : (1, H)      attention logit weight row (b2 dropped: softmax-invariant)
    # out_ref: (TB, TV, H)
    TB, R, H = qp_ref.shape
    TV = bm_ref.shape[0]

    qp = qp_ref[...]                                   # (TB, R, H)
    a = a_ref[...]                                     # (TB, R, H)
    bm = bm_ref[...]                                   # (TV, H)
    w2 = w2_ref[...]                                   # (1, H)

    # Per-role logits; the (TB, TV, R, H) joint tensor is never materialized --
    # only one (TB, TV, H) intermediate is live at a time.  R is small and static
    # so a Python loop is a full unroll (LLO scheduler sees everything).
    # logits layout (TB, R, TV): vocab lane-dense, roles on sublanes.
    logit_rows = []
    for r in range(R):
        joint_r = jnp.maximum(a[:, r, :][:, None, :] + bm[None, :, :], 0.0)  # (TB,TV,H)
        logit_rows.append(jnp.sum(joint_r * w2, axis=-1))                    # (TB,TV)
    logits = jnp.stack(logit_rows, axis=1)                                   # (TB,R,TV)

    # Numerically stable softmax over the role axis (sublane reduce).
    m = jnp.max(logits, axis=1, keepdims=True)
    e = jnp.exp(logits - m)
    denom = jnp.sum(e, axis=1, keepdims=True)
    att = e * pl.reciprocal(denom, approx=True)                              # (TB,R,TV)

    # out[b, v, h] = sum_r att[b, r, v] * qp[b, r, h]  (batched MXU, no transpose)
    out = lax.dot_general(att, qp,
                          dimension_numbers=(((1,), (1,)), ((0,), (0,))),
                          preferred_element_type=jnp.float32)                # (TB,TV,H)
    out_ref[...] = out.astype(out_ref.dtype)


def role2label_forward(q, params, *, batch_tile=None, vocab_tile=None,
                       out_dtype=jnp.float32):
    B, R, H2 = q.shape
    H = params["wq"].shape[0]
    V, E = params["label"].shape
    assert H2 == 2 * H

    f32 = jnp.float32

    # --- grid-invariant work, done ONCE in plain XLA (hoisted out of the kernel) ---
    # q projection + query-side attention projection (vocab-invariant).
    qp = (q.astype(f32) @ params["wq"].astype(f32).T
          + params["bq"].reshape(1, 1, H).astype(f32))                 # (B, R, H)
    a = qp @ params["w1v"].astype(f32).T                               # (B, R, H)
    # Batch-invariant label-side attention input, with b1 folded in.
    bm = (params["label"].astype(f32) @ params["w1l"].astype(f32).T
          + params["b1"].reshape(1, H).astype(f32))                    # (V, H)
    w2 = params["w2"].reshape(1, H).astype(f32)                        # (1, H)
    # b2 intentionally dropped (constant added pre-softmax is a no-op).

    TB = batch_tile if batch_tile is not None else min(B, 8)
    TV = vocab_tile if vocab_tile is not None else min(V, 256)
    # v7x has two TensorCores: make sure the grid has >= 2 independent steps.
    if (B // TB) * (V // TV) < 2:
        if TB > 1 and B % (TB // 2) == 0:
            TB //= 2
        elif TV > 1 and TV % 2 == 0 and V % (TV // 2) == 0:
            TV //= 2
    assert B % TB == 0 and V % TV == 0, "demo wrapper assumes divisible tiles"

    # Explicit VMEM budget (double-buffered blocks + live intermediates), capped at
    # 64 MiB so the limit is valid on v7x as well as v5e/v6e.
    per_step_bytes = 4 * (2 * TB * R * H        # qp block (double-buffered)
                          + 2 * TB * R * H      # a block
                          + 2 * TV * H          # bm block
                          + 2 * H               # w2
                          + 2 * TB * TV * H     # output block
                          + TB * TV * H         # per-role relu intermediate
                          + 3 * TB * R * TV)    # logits / exp / att
    vmem_limit = int(min(max(2 * per_step_bytes, 32 << 20), 64 << 20))

    flops = (4 * B * V * R * H       # per-role add + relu + mul + lane reduce
             + 2 * B * V * R * H     # att @ qp
             + 5 * B * V * R)        # softmax arithmetic
    cost = pl.CostEstimate(
        flops=flops,
        transcendentals=B * V * R,
        bytes_accessed=4 * (2 * B * R * H            # qp + a (resident across vocab steps)
                            + (B // TB) * V * H      # bm, re-fetched per batch tile
                            + H                      # w2
                            + B * V * H))            # output writeback

    out = pl.pallas_call(
        role2label_kernel,
        out_shape=jax.ShapeDtypeStruct((B, V, H), out_dtype),
        grid_spec=pltpu.PrefetchScalarGridSpec(
            num_scalar_prefetch=0,
            # vocab innermost: the (b, 0, 0) qp / a blocks stay resident across it.
            grid=(B // TB, V // TV),
            in_specs=[
                pl.BlockSpec((TB, R, H), lambda b, v: (b, 0, 0)),   # qp batch tile
                pl.BlockSpec((TB, R, H), lambda b, v: (b, 0, 0)),   # a batch tile
                pl.BlockSpec((TV, H),    lambda b, v: (v, 0)),      # bm vocab tile
                pl.BlockSpec((1, H),     lambda b, v: (0, 0)),      # w2 row
            ],
            out_specs=pl.BlockSpec((TB, TV, H), lambda b, v: (b, v, 0)),
        ),
        compiler_params=pltpu.CompilerParams(
            dimension_semantics=("parallel", "parallel"),
            vmem_limit_bytes=vmem_limit),
        cost_estimate=cost,
    )(qp, a, bm, w2)

    # (B, V, H) -> (B*V, H); row b*V+v is (batch b, label v), matching the PyTorch
    # expand/transpose/view ordering.  Done in the wrapper so the kernel writes a
    # lane-dense (TB, TV, H) block.
    return out.reshape(B * V, H)


def reference(q, p):
    """Pure-JAX replica of the PyTorch forward (for verification)."""
    B, R, _ = q.shape
    V, E = p["label"].shape
    H = p["wq"].shape[0]
    qp = q @ p["wq"].T + p["bq"][0]                                    # (B, R, H)
    qe = jnp.broadcast_to(qp[:, None], (B, V, R, H)).reshape(B * V, R, H)
    lab = jnp.broadcast_to(p["label"][None], (B, V, E)).reshape(B * V, E)
    vq = jnp.concatenate(
        [qe, jnp.broadcast_to(lab[:, None, :], (B * V, R, E))], axis=2)
    W1 = jnp.concatenate([p["w1v"], p["w1l"]], axis=1)                 # (H, H+E)
    joint = jax.nn.relu(vq @ W1.T + p["b1"][0])
    logits = joint @ p["w2"][0] + p["b2"][0, 0]                        # (B*V, R)
    att = jax.nn.softmax(logits, axis=1)[..., None]                    # (B*V, R, 1)
    return (att * qe).sum(1)                                           # (B*V, H)


if __name__ == "__main__":
    # Small, module-consistent shapes.  mlp_hidden is kept a multiple of 128 (the
    # real module uses 512) so all tiles/stores are lane-dense.
    B, R = 2, 8                      # batch, number of roles per image
    mlp_hidden, embed_hidden = 128, 64
    vocab = 8                        # label vocabulary size

    key = jax.random.PRNGKey(0)
    ks = jax.random.split(key, 8)
    params = {
        # q_word_project: Linear(2*mlp_hidden, mlp_hidden)
        "wq": 0.1 * jax.random.normal(ks[0], (mlp_hidden, 2 * mlp_hidden), jnp.float32),
        "bq": 0.1 * jax.random.normal(ks[1], (1, mlp_hidden), jnp.float32),
        # label_embedding.weight: (vocab, embed_hidden)
        "label": jax.random.normal(ks[2], (vocab, embed_hidden), jnp.float32),
        # Attention FCNet([v_dim + q_dim, num_hid]) effective weight, split by columns
        "w1v": 0.1 * jax.random.normal(ks[3], (mlp_hidden, mlp_hidden), jnp.float32),
        "w1l": 0.1 * jax.random.normal(ks[4], (mlp_hidden, embed_hidden), jnp.float32),
        "b1": 0.1 * jax.random.normal(ks[5], (1, mlp_hidden), jnp.float32),
        # Attention logit Linear(num_hid, 1) effective weight/bias
        "w2": 0.1 * jax.random.normal(ks[6], (1, mlp_hidden), jnp.float32),
        "b2": jnp.zeros((1, 1), jnp.float32),
    }
    q = jax.random.normal(ks[7], (B, R, 2 * mlp_hidden), jnp.float32)

    out = role2label_forward(q, params)
    jax.block_until_ready(out)

    ref = reference(q, params)
    assert out.shape == (B * vocab, mlp_hidden)
    assert jnp.allclose(out, ref, atol=2e-2, rtol=2e-2), "mismatch vs pure-JAX reference"
    print("KERNEL_OK")
</pallas_src>

<mosaic_0001>
module attributes {stable_mosaic.version = 11 : i64} {
  func.func @role2label_kernel(%arg0: i32, %arg1: i32, %arg2: memref<1x8x128xf32, #tpu.memory_space<vmem>>, %arg3: memref<1x8x128xf32, #tpu.memory_space<vmem>>, %arg4: memref<8x128xf32, #tpu.memory_space<vmem>>, %arg5: memref<1x128xf32, #tpu.memory_space<vmem>>, %arg6: memref<1x8x128xf32, #tpu.memory_space<vmem>>) attributes {dimension_semantics = [#tpu.dimension_semantics<parallel>, #tpu.dimension_semantics<parallel>], iteration_bounds = array<i64: 2, 1>, scalar_prefetch = 0 : i64, scratch_operands = 0 : i64, tpu.core_type = #tpu.core_type<tc>, window_params = [{transform_indices = @transform_0, window_bounds = array<i64: 1, 8, 128>}, {transform_indices = @transform_1, window_bounds = array<i64: 1, 8, 128>}, {transform_indices = @transform_2, window_bounds = array<i64: 8, 128>}, {pipeline_mode = #tpu.pipeline_mode<synchronous>, transform_indices = @transform_3, window_bounds = array<i64: 1, 128>}, {transform_indices = @transform_4, window_bounds = array<i64: 1, 8, 128>}]} {
    %c0 = arith.constant 0 : index
    %c0_0 = arith.constant 0 : index
    %c0_1 = arith.constant 0 : index
    %0 = vector.load %arg2[%c0, %c0_0, %c0_1] : memref<1x8x128xf32, #tpu.memory_space<vmem>>, vector<1x8x128xf32>
    %c0_2 = arith.constant 0 : index
    %c0_3 = arith.constant 0 : index
    %c0_4 = arith.constant 0 : index
    %1 = vector.load %arg3[%c0_2, %c0_3, %c0_4] : memref<1x8x128xf32, #tpu.memory_space<vmem>>, vector<1x8x128xf32>
    %c0_5 = arith.constant 0 : index
    %c0_6 = arith.constant 0 : index
    %2 = vector.load %arg4[%c0_5, %c0_6] : memref<8x128xf32, #tpu.memory_space<vmem>>, vector<8x128xf32>
    %c0_7 = arith.constant 0 : index
    %c0_8 = arith.constant 0 : index
    %3 = vector.load %arg5[%c0_7, %c0_8] : memref<1x128xf32, #tpu.memory_space<vmem>>, vector<1x128xf32>
    %4 = vector.extract_strided_slice %1 {offsets = [0, 0, 0], sizes = [1, 1, 128], strides = [1, 1, 1]} : vector<1x8x128xf32> to vector<1x1x128xf32>
    %5 = vector.shape_cast %4 : vector<1x1x128xf32> to vector<1x128xf32>
    %6 = vector.shape_cast %5 : vector<1x128xf32> to vector<1x1x128xf32>
    %7 = vector.shape_cast %2 : vector<8x128xf32> to vector<1x8x128xf32>
    %8 = vector.broadcast %6 : vector<1x1x128xf32> to vector<1x8x128xf32>
    %9 = arith.addf %8, %7 : vector<1x8x128xf32>
    %cst = arith.constant 0.000000e+00 : f32
    %10 = vector.broadcast %cst : f32 to vector<1x8x128xf32>
    %11 = arith.maximumf %9, %10 : vector<1x8x128xf32>
    %12 = vector.shape_cast %3 : vector<1x128xf32> to vector<1x1x128xf32>
    %13 = vector.broadcast %12 : vector<1x1x128xf32> to vector<1x8x128xf32>
    %14 = arith.mulf %11, %13 : vector<1x8x128xf32>
    %cst_9 = arith.constant dense<0.000000e+00> : vector<1x8xf32>
    %15 = vector.multi_reduction <add>, %14, %cst_9 [2] : vector<1x8x128xf32> to vector<1x8xf32>
    %16 = vector.extract_strided_slice %1 {offsets = [0, 1, 0], sizes = [1, 1, 128], strides = [1, 1, 1]} : vector<1x8x128xf32> to vector<1x1x128xf32>
    %17 = vector.shape_cast %16 : vector<1x1x128xf32> to vector<1x128xf32>
    %18 = vector.shape_cast %17 : vector<1x128xf32> to vector<1x1x128xf32>
    %19 = vector.shape_cast %2 : vector<8x128xf32> to vector<1x8x128xf32>
    %20 = vector.broadcast %18 : vector<1x1x128xf32> to vector<1x8x128xf32>
    %21 = arith.addf %20, %19 : vector<1x8x128xf32>
    %cst_10 = arith.constant 0.000000e+00 : f32
    %22 = vector.broadcast %cst_10 : f32 to vector<1x8x128xf32>
    %23 = arith.maximumf %21, %22 : vector<1x8x128xf32>
    %24 = vector.shape_cast %3 : vector<1x128xf32> to vector<1x1x128xf32>
    %25 = vector.broadcast %24 : vector<1x1x128xf32> to vector<1x8x128xf32>
    %26 = arith.mulf %23, %25 : vector<1x8x128xf32>
    %cst_11 = arith.constant dense<0.000000e+00> : vector<1x8xf32>
    %27 = vector.multi_reduction <add>, %26, %cst_11 [2] : vector<1x8x128xf32> to vector<1x8xf32>
    %28 = vector.extract_strided_slice %1 {offsets = [0, 2, 0], sizes = [1, 1, 128], strides = [1, 1, 1]} : vector<1x8x128xf32> to vector<1x1x128xf32>
    %29 = vector.shape_cast %28 : vector<1x1x128xf32> to vector<1x128xf32>
    %30 = vector.shape_cast %29 : vector<1x128xf32> to vector<1x1x128xf32>
    %31 = vector.shape_cast %2 : vector<8x128xf32> to vector<1x8x128xf32>
    %32 = vector.broadcast %30 : vector<1x1x128xf32> to vector<1x8x128xf32>
    %33 = arith.addf %32, %31 : vector<1x8x128xf32>
    %cst_12 = arith.constant 0.000000e+00 : f32
    %34 = vector.broadcast %cst_12 : f32 to vector<1x8x128xf32>
    %35 = arith.maximumf %33, %34 : vector<1x8x128xf32>
    %36 = vector.shape_cast %3 : vector<1x128xf32> to vector<1x1x128xf32>
    %37 = vector.broadcast %36 : vector<1x1x128xf32> to vector<1x8x128xf32>
    %38 = arith.mulf %35, %37 : vector<1x8x128xf32>
    %cst_13 = arith.constant dense<0.000000e+00> : vector<1x8xf32>
    %39 = vector.multi_reduction <add>, %38, %cst_13 [2] : vector<1x8x128xf32> to vector<1x8xf32>
    %40 = vector.extract_strided_slice %1 {offsets = [0, 3, 0], sizes = [1, 1, 128], strides = [1, 1, 1]} : vector<1x8x128xf32> to vector<1x1x128xf32>
    %41 = vector.shape_cast %40 : vector<1x1x128xf32> to vector<1x128xf32>
    %42 = vector.shape_cast %41 : vector<1x128xf32> to vector<1x1x128xf32>
    %43 = vector.shape_cast %2 : vector<8x128xf32> to vector<1x8x128xf32>
    %44 = vector.broadcast %42 : vector<1x1x128xf32> to vector<1x8x128xf32>
    %45 = arith.addf %44, %43 : vector<1x8x128xf32>
    %cst_14 = arith.constant 0.000000e+00 : f32
    %46 = vector.broadcast %cst_14 : f32 to vector<1x8x128xf32>
    %47 = arith.maximumf %45, %46 : vector<1x8x128xf32>
    %48 = vector.shape_cast %3 : vector<1x128xf32> to vector<1x1x128xf32>
    %49 = vector.broadcast %48 : vector<1x1x128xf32> to vector<1x8x128xf32>
    %50 = arith.mulf %47, %49 : vector<1x8x128xf32>
    %cst_15 = arith.constant dense<0.000000e+00> : vector<1x8xf32>
    %51 = vector.multi_reduction <add>, %50, %cst_15 [2] : vector<1x8x128xf32> to vector<1x8xf32>
    %52 = vector.extract_strided_slice %1 {offsets = [0, 4, 0], sizes = [1, 1, 128], strides = [1, 1, 1]} : vector<1x8x128xf32> to vector<1x1x128xf32>
    %53 = vector.shape_cast %52 : vector<1x1x128xf32> to vector<1x128xf32>
    %54 = vector.shape_cast %53 : vector<1x128xf32> to vector<1x1x128xf32>
    %55 = vector.shape_cast %2 : vector<8x128xf32> to vector<1x8x128xf32>
    %56 = vector.broadcast %54 : vector<1x1x128xf32> to vector<1x8x128xf32>
    %57 = arith.addf %56, %55 : vector<1x8x128xf32>
    %cst_16 = arith.constant 0.000000e+00 : f32
    %58 = vector.broadcast %cst_16 : f32 to vector<1x8x128xf32>
    %59 = arith.maximumf %57, %58 : vector<1x8x128xf32>
    %60 = vector.shape_cast %3 : vector<1x128xf32> to vector<1x1x128xf32>
    %61 = vector.broadcast %60 : vector<1x1x128xf32> to vector<1x8x128xf32>
    %62 = arith.mulf %59, %61 : vector<1x8x128xf32>
    %cst_17 = arith.constant dense<0.000000e+00> : vector<1x8xf32>
    %63 = vector.multi_reduction <add>, %62, %cst_17 [2] : vector<1x8x128xf32> to vector<1x8xf32>
    %64 = vector.extract_strided_slice %1 {offsets = [0, 5, 0], sizes = [1, 1, 128], strides = [1, 1, 1]} : vector<1x8x128xf32> to vector<1x1x128xf32>
    %65 = vector.shape_cast %64 : vector<1x1x128xf32> to vector<1x128xf32>
    %66 = vector.shape_cast %65 : vector<1x128xf32> to vector<1x1x128xf32>
    %67 = vector.shape_cast %2 : vector<8x128xf32> to vector<1x8x128xf32>
    %68 = vector.broadcast %66 : vector<1x1x128xf32> to vector<1x8x128xf32>
    %69 = arith.addf %68, %67 : vector<1x8x128xf32>
    %cst_18 = arith.constant 0.000000e+00 : f32
    %70 = vector.broadcast %cst_18 : f32 to vector<1x8x128xf32>
    %71 = arith.maximumf %69, %70 : vector<1x8x128xf32>
    %72 = vector.shape_cast %3 : vector<1x128xf32> to vector<1x1x128xf32>
    %73 = vector.broadcast %72 : vector<1x1x128xf32> to vector<1x8x128xf32>
    %74 = arith.mulf %71, %73 : vector<1x8x128xf32>
    %cst_19 = arith.constant dense<0.000000e+00> : vector<1x8xf32>
    %75 = vector.multi_reduction <add>, %74, %cst_19 [2] : vector<1x8x128xf32> to vector<1x8xf32>
    %76 = vector.extract_strided_slice %1 {offsets = [0, 6, 0], sizes = [1, 1, 128], strides = [1, 1, 1]} : vector<1x8x128xf32> to vector<1x1x128xf32>
    %77 = vector.shape_cast %76 : vector<1x1x128xf32> to vector<1x128xf32>
    %78 = vector.shape_cast %77 : vector<1x128xf32> to vector<1x1x128xf32>
    %79 = vector.shape_cast %2 : vector<8x128xf32> to vector<1x8x128xf32>
    %80 = vector.broadcast %78 : vector<1x1x128xf32> to vector<1x8x128xf32>
    %81 = arith.addf %80, %79 : vector<1x8x128xf32>
    %cst_20 = arith.constant 0.000000e+00 : f32
    %82 = vector.broadcast %cst_20 : f32 to vector<1x8x128xf32>
    %83 = arith.maximumf %81, %82 : vector<1x8x128xf32>
    %84 = vector.shape_cast %3 : vector<1x128xf32> to vector<1x1x128xf32>
    %85 = vector.broadcast %84 : vector<1x1x128xf32> to vector<1x8x128xf32>
    %86 = arith.mulf %83, %85 : vector<1x8x128xf32>
    %cst_21 = arith.constant dense<0.000000e+00> : vector<1x8xf32>
    %87 = vector.multi_reduction <add>, %86, %cst_21 [2] : vector<1x8x128xf32> to vector<1x8xf32>
    %88 = vector.extract_strided_slice %1 {offsets = [0, 7, 0], sizes = [1, 1, 128], strides = [1, 1, 1]} : vector<1x8x128xf32> to vector<1x1x128xf32>
    %89 = vector.shape_cast %88 : vector<1x1x128xf32> to vector<1x128xf32>
    %90 = vector.shape_cast %89 : vector<1x128xf32> to vector<1x1x128xf32>
    %91 = vector.shape_cast %2 : vector<8x128xf32> to vector<1x8x128xf32>
    %92 = vector.broadcast %90 : vector<1x1x128xf32> to vector<1x8x128xf32>
    %93 = arith.addf %92, %91 : vector<1x8x128xf32>
    %cst_22 = arith.constant 0.000000e+00 : f32
    %94 = vector.broadcast %cst_22 : f32 to vector<1x8x128xf32>
    %95 = arith.maximumf %93, %94 : vector<1x8x128xf32>
    %96 = vector.shape_cast %3 : vector<1x128xf32> to vector<1x1x128xf32>
    %97 = vector.broadcast %96 : vector<1x1x128xf32> to vector<1x8x128xf32>
    %98 = arith.mulf %95, %97 : vector<1x8x128xf32>
    %cst_23 = arith.constant dense<0.000000e+00> : vector<1x8xf32>
    %99 = vector.multi_reduction <add>, %98, %cst_23 [2] : vector<1x8x128xf32> to vector<1x8xf32>
    %100 = vector.shape_cast %15 : vector<1x8xf32> to vector<1x1x8xf32>
    %101 = vector.shape_cast %27 : vector<1x8xf32> to vector<1x1x8xf32>
    %102 = vector.shape_cast %39 : vector<1x8xf32> to vector<1x1x8xf32>
    %103 = vector.shape_cast %51 : vector<1x8xf32> to vector<1x1x8xf32>
    %104 = vector.shape_cast %63 : vector<1x8xf32> to vector<1x1x8xf32>
    %105 = vector.shape_cast %75 : vector<1x8xf32> to vector<1x1x8xf32>
    %106 = vector.shape_cast %87 : vector<1x8xf32> to vector<1x1x8xf32>
    %107 = vector.shape_cast %99 : vector<1x8xf32> to vector<1x1x8xf32>
    %108 = tpu.concatenate %100, %101, %102, %103, %104, %105, %106, %107 in 1 : vector<1x1x8xf32>, vector<1x1x8xf32>, vector<1x1x8xf32>, vector<1x1x8xf32>, vector<1x1x8xf32>, vector<1x1x8xf32>, vector<1x1x8xf32>, vector<1x1x8xf32> -> vector<1x8x8xf32>
    %cst_24 = arith.constant dense<0xFF800000> : vector<1x8xf32>
    %109 = vector.multi_reduction <maximumf>, %108, %cst_24 [1] : vector<1x8x8xf32> to vector<1x8xf32>
    %110 = vector.shape_cast %109 : vector<1x8xf32> to vector<1x1x8xf32>
    %111 = vector.broadcast %110 : vector<1x1x8xf32> to vector<1x8x8xf32>
    %112 = arith.subf %108, %111 : vector<1x8x8xf32>
    %113 = math.exp %112 : vector<1x8x8xf32>
    %cst_25 = arith.constant dense<0.000000e+00> : vector<1x8xf32>
    %114 = vector.multi_reduction <add>, %113, %cst_25 [1] : vector<1x8x8xf32> to vector<1x8xf32>
    %115 = vector.shape_cast %114 : vector<1x8xf32> to vector<1x1x8xf32>
    %116 = tpu.reciprocal %115 {approx = true} : vector<1x1x8xf32> -> vector<1x1x8xf32>
    %117 = vector.broadcast %116 : vector<1x1x8xf32> to vector<1x8x8xf32>
    %118 = arith.mulf %113, %117 : vector<1x8x8xf32>
    %cst_26 = arith.constant dense<0.000000e+00> : vector<1x8x128xf32>
    %119 = tpu.matmul %118, %0, %cst_26 {dimension_numbers = #tpu.dot_dimension_numbers<[1], [1], [2], [2], [0, 0, 0, 2, 1, 2], [0], [0]>} : vector<1x8x8xf32>, vector<1x8x128xf32>, vector<1x8x128xf32> -> vector<1x8x128xf32>
    %c0_27 = arith.constant 0 : index
    %c0_28 = arith.constant 0 : index
    %c0_29 = arith.constant 0 : index
    %120 = vector.load %arg6[%c0_27, %c0_28, %c0_29] : memref<1x8x128xf32, #tpu.memory_space<vmem>>, vector<1x8x128xf32>
    tpu.vector_store %arg6[%c0_27, %c0_28, %c0_29], %119 {strides = array<i32>} : memref<1x8x128xf32, #tpu.memory_space<vmem>>, vector<1x8x128xf32>,
    return
  }
  func.func @transform_0(%arg0: i32, %arg1: i32) -> (i32, i32, i32) {
    %c0_i32 = arith.constant 0 : i32
    %c0_i32_0 = arith.constant 0 : i32
    %c0_i32_1 = arith.constant 0 : i32
    return %arg0, %c0_i32, %c0_i32_0 : i32, i32, i32
  }
  func.func @transform_1(%arg0: i32, %arg1: i32) -> (i32, i32, i32) {
    %c0_i32 = arith.constant 0 : i32
    %c0_i32_0 = arith.constant 0 : i32
    %c0_i32_1 = arith.constant 0 : i32
    return %arg0, %c0_i32, %c0_i32_0 : i32, i32, i32
  }
  func.func @transform_2(%arg0: i32, %arg1: i32) -> (i32, i32) {
    %c0_i32 = arith.constant 0 : i32
    %c0_i32_0 = arith.constant 0 : i32
    return %arg1, %c0_i32 : i32, i32
  }
  func.func @transform_3(%arg0: i32, %arg1: i32) -> (i32, i32) {
    %c0_i32 = arith.constant 0 : i32
    %c0_i32_0 = arith.constant 0 : i32
    %c0_i32_1 = arith.constant 0 : i32
    return %c0_i32, %c0_i32_0 : i32, i32
  }
  func.func @transform_4(%arg0: i32, %arg1: i32) -> (i32, i32, i32) {
    %c0_i32 = arith.constant 0 : i32
    %c0_i32_0 = arith.constant 0 : i32
    return %arg0, %arg1, %c0_i32 : i32, i32, i32
  }
}

</mosaic_0001>

<llo_original>
// kernel: tpu_custom_call.1
$region0: #{tpu_custom_call.1}
  #allocation0 [shape = 'u32[]', space=smem, size = 0x4, offset = 0x4, fixed_abs, tag = 'smem constant byte address 0x4 - core index']
  #allocation1 [shape = 'u32[72,128]{1,0:T(1,128)}', space=vmem, size = 0x9000, scoped, tag = 'internal scratch']
  %s0 = inlined_call_operand.hbm [shape: f32[2,8,128], index: 0, kind: input, shape index: {}]
  %s1 = inlined_call_operand.hbm [shape: f32[2,8,128], index: 1, kind: input, shape index: {}]
  %s2 = inlined_call_operand.hbm [shape: f32[8,128], index: 2, kind: input, shape index: {}]
  %s3 = inlined_call_operand.vmem [shape: f32[1,128], index: 3, kind: input, shape index: {}]
  %s4 = inlined_call_operand.hbm [shape: f32[2,8,128], index: 4, kind: output, shape index: {}]
  %s5 = sld [smem:[#allocation0]]
  $region61: #{tpu_custom_call.1} parent=0
    _
  %s7 = ssub.s32 1, %s5
  %s8 = scalar_select 0, %s7, %s5
  $region1: #{tpu_custom_call.1} parent=0
    #allocation2 [shape = 'u8[8192]{0}', space=vmem, size = 0x2000, scoped, tag = 'input window, operand 0']
    #allocation3 [shape = 's32[2]{0}', space=sflag, size = 0x8, scoped, tag = 'scoped memory for tpu_custom_call.1']
    #allocation4 [shape = 's32[2]{0}', space=sflag, size = 0x8, scoped, tag = 'scoped memory for tpu_custom_call.1']
    #allocation5 [shape = 'u8[8192]{0}', space=vmem, size = 0x2000, scoped, tag = 'input window, operand 1']
    #allocation6 [shape = 's32[2]{0}', space=sflag, size = 0x8, scoped, tag = 'scoped memory for tpu_custom_call.1']
    #allocation7 [shape = 'u8[4096]{0}', space=vmem, size = 0x1000, scoped, tag = 'input window, operand 2, single buffered']
    #allocation8 [shape = 'u8[8192]{0}', space=vmem, size = 0x2000, scoped, tag = 'output window, operand 0']
    %9 = vsyncpa [#allocation3], 0
    %s10 = scalar_lea.sflag [#allocation3], 1
    %11 = vsyncpa %s10, 0
    %12 = vsyncpa [#allocation6], 0
    %s13 = scalar_lea.sflag [#allocation6], 1
    %14 = vsyncpa %s13, 0
    %15 = vsyncpa [#allocation4], 0
    %s16 = scalar_lea.sflag [#allocation4], 1
    %17 = vsyncpa %s16, 0
    loop: start=0, step=1, limit=4
    $region2: #{tpu_custom_call.1} parent=1 // loop_pre_header
      _
    $region3: #{tpu_custom_call.1} parent=1 // loop_header
      %s19 = sphi 0, %s23
      %p20 = scmp.ge.s32.totalorder %s19, 4
      %s26 = sphi 0, %s38
      %s27 = sphi 0, %s34
      %s28 = sphi 0, %s26
      %s29 = sphi 0, %s27
      %s30 = sphi 0, %s28
      %s31 = sphi 0, %s29
      %s41 = sphi 0, %s43
      %s44 = sphi 0, %s41
      %s45 = sphi 0, %s44
      %s61 = sphi 0, %s45
      %s67 = sphi 0, %s69
      %s70 = sphi 0, %s67
      %s71 = sphi 0, %s70
      %s87 = sphi 0, %s71
      %s93 = sphi 0, %s95
      %s96 = sphi 0, %s93
      %s97 = sphi 0, %s96
      %s113 = sphi 0, %s97
      %s117 = sphi 0, %s117
      %s119 = sphi 0, %s117
      %s120 = sphi 0, %s119
      %s134 = sphi 0, %s120
      %s142 = sphi 0, %s144
      %s145 = sphi 0, %s142
      %s146 = sphi 0, %s145
      %s162 = sphi 0, %s146
    $region4: #{tpu_custom_call.1} parent=1 // loop_header_branch
      %22 = sbr.rel (%p20) target = $region8
    $region5: #{tpu_custom_call.1} parent=1 // loop_body
      %s24 = ssub.s32 %s19, 1
      %s25 = ssub.s32 %s19, 2
      %s32 = sadd.s32 1, %s27
      %p33 = scmp.ge.s32.totalorder %s32, 1
      %s34 = scalar_select %p33, 0, %s32
      %s35 = sadd.s32 1, %s26
      %s36 = scalar_select %p33, %s35, %s26
      %p37 = scmp.ge.s32.totalorder %s36, 2
      %s38 = scalar_select %p37, 0, %s36
      %s39 = ssub.s32 %s26, %s38
      %p40 = scmp.eq.s32.totalorder %s39, 0
      %s42 = sadd.s32 %s41, 1
      %s43 = scalar_select %p40, %s41, %s42
      %p46 = pneg %p40
      %p47 = scmp.eq.s32.totalorder %s19, 1
      %p48 = por %p46, %p47
      %p49 = scmp.ne.s32.totalorder %s41, %s44
      %p50 = scmp.eq.s32.totalorder %s19, 0
      %p51 = por %p49, %p50
      %p52 = scmp.ne.s32.totalorder %s41, %s44
      %p53 = scmp.eq.s32.totalorder %s24, 1
      %p54 = por %p52, %p53
      %p55 = scmp.ne.s32.totalorder %s44, %s45
      %p56 = scmp.eq.s32.totalorder %s24, 0
      %p57 = por %p55, %p56
      %p58 = scmp.ne.s32.totalorder %s44, %s45
      %p59 = scmp.eq.s32.totalorder %s25, 1
      %p60 = por %p58, %p59
      %p62 = scmp.ne.s32.totalorder %s45, %s61
      %p63 = scmp.eq.s32.totalorder %s25, 0
      %p64 = por %p62, %p63
      %s65 = ssub.s32 %s26, %s38
      %p66 = scmp.eq.s32.totalorder %s65, 0
      %s68 = sadd.s32 %s67, 1
      %s69 = scalar_select %p66, %s67, %s68
      %p72 = pneg %p66
      %p73 = scmp.eq.s32.totalorder %s19, 1
      %p74 = por %p72, %p73
      %p75 = scmp.ne.s32.totalorder %s67, %s70
      %p76 = scmp.eq.s32.totalorder %s19, 0
      %p77 = por %p75, %p76
      %p78 = scmp.ne.s32.totalorder %s67, %s70
      %p79 = scmp.eq.s32.totalorder %s24, 1
      %p80 = por %p78, %p79
      %p81 = scmp.ne.s32.totalorder %s70, %s71
      %p82 = scmp.eq.s32.totalorder %s24, 0
      %p83 = por %p81, %p82
      %p84 = scmp.ne.s32.totalorder %s70, %s71
      %p85 = scmp.eq.s32.totalorder %s25, 1
      %p86 = por %p84, %p85
      %p88 = scmp.ne.s32.totalorder %s71, %s87
      %p89 = scmp.eq.s32.totalorder %s25, 0
      %p90 = por %p88, %p89
      %s91 = ssub.s32 %s27, %s34
      %p92 = scmp.eq.s32.totalorder %s91, 0
      %s94 = sadd.s32 %s93, 1
      %s95 = scalar_select %p92, %s93, %s94
      %p98 = pneg %p92
      %p99 = scmp.eq.s32.totalorder %s19, 1
      %p100 = por %p98, %p99
      %p101 = scmp.ne.s32.totalorder %s93, %s96
      %p102 = scmp.eq.s32.totalorder %s19, 0
      %p103 = por %p101, %p102
      %p104 = scmp.ne.s32.totalorder %s93, %s96
      %p105 = scmp.eq.s32.totalorder %s24, 1
      %p106 = por %p104, %p105
      %p107 = scmp.ne.s32.totalorder %s96, %s97
      %p108 = scmp.eq.s32.totalorder %s24, 0
      %p109 = por %p107, %p108
      %p110 = scmp.ne.s32.totalorder %s96, %s97
      %p111 = scmp.eq.s32.totalorder %s25, 1
      %p112 = por %p110, %p111
      %p114 = scmp.ne.s32.totalorder %s97, %s113
      %p115 = scmp.eq.s32.totalorder %s25, 0
      %p116 = por %p114, %p115
      %s118 = sadd.s32 %s117, 1
      %p121 = scmp.eq.s32.totalorder %s19, 1
      %p122 = scmp.ne.s32.totalorder %s117, %s119
      %p123 = scmp.eq.s32.totalorder %s19, 0
      %p124 = por %p122, %p123
      %p125 = scmp.ne.s32.totalorder %s117, %s119
      %p126 = scmp.eq.s32.totalorder %s24, 1
      %p127 = por %p125, %p126
      %p128 = scmp.ne.s32.totalorder %s119, %s120
      %p129 = scmp.eq.s32.totalorder %s24, 0
      %p130 = por %p128, %p129
      %p131 = scmp.ne.s32.totalorder %s119, %s120
      %p132 = scmp.eq.s32.totalorder %s25, 1
      %p133 = por %p131, %p132
      %p135 = scmp.ne.s32.totalorder %s120, %s134
      %p136 = scmp.eq.s32.totalorder %s25, 0
      %p137 = por %p135, %p136
      %s138 = ssub.s32 %s26, %s38
      %s139 = ssub.s32 %s27, %s34
      %s140 = sor.u32 %s138, %s139
      %p141 = scmp.eq.s32.totalorder %s140, 0
      %s143 = sadd.s32 %s142, 1
      %s144 = scalar_select %p141, %s142, %s143
      %p147 = pneg %p141
      %p148 = scmp.eq.s32.totalorder %s19, 1
      %p149 = por %p147, %p148
      %p150 = scmp.ne.s32.totalorder %s142, %s145
      %p151 = scmp.eq.s32.totalorder %s19, 0
      %p152 = por %p150, %p151
      %p153 = scmp.ne.s32.totalorder %s142, %s145
      %p154 = scmp.eq.s32.totalorder %s24, 1
      %p155 = por %p153, %p154
      %p156 = scmp.ne.s32.totalorder %s145, %s146
      %p157 = scmp.eq.s32.totalorder %s24, 0
      %p158 = por %p156, %p157
      %p159 = scmp.ne.s32.totalorder %s145, %s146
      %p160 = scmp.eq.s32.totalorder %s25, 1
      %p161 = por %p159, %p160
      %p163 = scmp.ne.s32.totalorder %s146, %s162
      %p164 = scmp.eq.s32.totalorder %s25, 0
      %p165 = por %p163, %p164
      %p166 = scmp.le.s32.totalorder 1, %s19
      %p167 = scmp.lt.s32.totalorder %s19, 3
      %p168 = pnand %p166, %p167
      %p169 = pneg %p168
      // Predicated region
      $region9: #{tpu_custom_call.1} parent=5 // pred_check
        _
      $region10: #{tpu_custom_call.1} parent=5 // pred_check_branch
        %171 = sbr.rel (%p168) target = $region12
      $region11: #{tpu_custom_call.1} parent=5 // pred_region
        %s172 = ssub.s32 %s19, 1
        // Predicated region
        $region13: #{tpu_custom_call.1} parent=11 // pred_check
          %p173 = pneg %p109
        $region14: #{tpu_custom_call.1} parent=11 // pred_check_branch
          %175 = sbr.rel (%p173) target = $region16
        $region15: #{tpu_custom_call.1} parent=11 // pred_region
          %177 = vsyncadd [#allocation6], 0
          %s178 = smul.addr %s29, 8
          %s179 = scalar_lea.hbm %s2, %s178
          %s181 = sshll.u32 %s179, 4
          %s182 = int_to_ptr.hbm [resolvable:$true] %s181
          %s183 = sshll.u32 [#allocation7], 4
          %s184 = int_to_ptr.vmem [resolvable:$true] %s183
          %186 = dma.hbm_to_vmem [thread:$0]  %s182, 128, %s184, [#allocation6]
        $region16: #{tpu_custom_call.1} parent=11 // pred_fallthru
          _
        // Predicated region
        $region17: #{tpu_custom_call.1} parent=11 // pred_check
          %p187 = pneg %p130
        $region18: #{tpu_custom_call.1} parent=11 // pred_check_branch
          %189 = sbr.rel (%p187) target = $region20
        $region19: #{tpu_custom_call.1} parent=11 // pred_region
          _
        $region20: #{tpu_custom_call.1} parent=11 // pred_fallthru
          _
      $region12: #{tpu_custom_call.1} parent=5 // pred_fallthru
        _
      %p190 = scmp.lt.s32.totalorder %s19, 2
      // Predicated region
      $region21: #{tpu_custom_call.1} parent=5 // pred_check
        %p191 = pneg %p190
      $region22: #{tpu_custom_call.1} parent=5 // pred_check_branch
        %193 = sbr.rel (%p191) target = $region24
      $region23: #{tpu_custom_call.1} parent=5 // pred_region
        // Predicated region
        $region25: #{tpu_custom_call.1} parent=23 // pred_check
          %p194 = pneg %p51
        $region26: #{tpu_custom_call.1} parent=23 // pred_check_branch
          %196 = sbr.rel (%p194) target = $region28
        $region27: #{tpu_custom_call.1} parent=23 // pred_region
          %s197 = sand.u32 %s41, 1
          %s198 = scalar_lea.sflag [#allocation3], %s197
          %s199 = sand.u32 %s41, 1
          %s200 = smul.addr %s199, 8
          %s201 = scalar_lea.vmem [#allocation2], %s200
          %203 = vsyncadd %s198, 0
          %s204 = smul.addr %s26, 8
          %s205 = scalar_lea.hbm %s0, %s204
          %s207 = sshll.u32 %s205, 4
          %s208 = int_to_ptr.hbm [resolvable:$true] %s207
          %s209 = sshll.u32 %s201, 4
          %s210 = int_to_ptr.vmem [resolvable:$true] %s209
          %212 = dma.hbm_to_vmem [thread:$0]  %s208, 128, %s210, %s198
        $region28: #{tpu_custom_call.1} parent=23 // pred_fallthru
          _
        // Predicated region
        $region29: #{tpu_custom_call.1} parent=23 // pred_check
          %p213 = pneg %p77
        $region30: #{tpu_custom_call.1} parent=23 // pred_check_branch
          %215 = sbr.rel (%p213) target = $region32
        $region31: #{tpu_custom_call.1} parent=23 // pred_region
          %s216 = sand.u32 %s19, 1
          %s217 = scalar_lea.sflag [#allocation6], %s216
          %s218 = sand.u32 %s67, 1
          %s219 = smul.addr %s218, 8
          %s220 = scalar_lea.vmem [#allocation5], %s219
          %222 = vsyncadd %s217, 0
          %s223 = smul.addr %s26, 8
          %s224 = scalar_lea.hbm %s1, %s223
          %s226 = sshll.u32 %s224, 4
          %s227 = int_to_ptr.hbm [resolvable:$true] %s226
          %s228 = sshll.u32 %s220, 4
          %s229 = int_to_ptr.vmem [resolvable:$true] %s228
          %231 = dma.hbm_to_vmem [thread:$0]  %s227, 128, %s229, %s217
        $region32: #{tpu_custom_call.1} parent=23 // pred_fallthru
          _
      $region24: #{tpu_custom_call.1} parent=5 // pred_fallthru
        _
      %p232 = scmp.le.s32.totalorder 1, %s19
      %p233 = scmp.lt.s32.totalorder %s19, 3
      %p234 = pnand %p232, %p233
      %p235 = pneg %p234
      // Predicated region
      $region33: #{tpu_custom_call.1} parent=5 // pred_check
        _
      $region34: #{tpu_custom_call.1} parent=5 // pred_check_branch
        %237 = sbr.rel (%p234) target = $region36
      $region35: #{tpu_custom_call.1} parent=5 // pred_region
        %s238 = ssub.s32 %s19, 1
        %s239 = sand.u32 %s44, 1
        %s240 = scalar_lea.sflag [#allocation3], %s239
        %s241 = sand.u32 %s44, 1
        %s242 = smul.addr %s241, 8
        %s243 = scalar_lea.vmem [#allocation2], %s242
        // Predicated region
        $region37: #{tpu_custom_call.1} parent=35 // pred_check
          %p244 = pneg %p57
        $region38: #{tpu_custom_call.1} parent=35 // pred_check_branch
          %246 = sbr.rel (%p244) target = $region40
        $region39: #{tpu_custom_call.1} parent=35 // pred_region
          %248 = dma.done %s240, 128
        $region40: #{tpu_custom_call.1} parent=35 // pred_fallthru
          _
        %s249 = sand.u32 %s24, 1
        %s250 = scalar_lea.sflag [#allocation6], %s249
        %s251 = sand.u32 %s70, 1
        %s252 = smul.addr %s251, 8
        %s253 = scalar_lea.vmem [#allocation5], %s252
        // Predicated region
        $region41: #{tpu_custom_call.1} parent=35 // pred_check
          %p254 = pneg %p83
        $region42: #{tpu_custom_call.1} parent=35 // pred_check_branch
          %256 = sbr.rel (%p254) target = $region44
        $region43: #{tpu_custom_call.1} parent=35 // pred_region
          %258 = dma.done %s250, 128
        $region44: #{tpu_custom_call.1} parent=35 // pred_fallthru
          _
        // Predicated region
        $region45: #{tpu_custom_call.1} parent=35 // pred_check
          %p259 = pneg %p109
        $region46: #{tpu_custom_call.1} parent=35 // pred_check_branch
          %261 = sbr.rel (%p259) target = $region48
        $region47: #{tpu_custom_call.1} parent=35 // pred_region
          %263 = dma.done [#allocation6], 128
        $region48: #{tpu_custom_call.1} parent=35 // pred_fallthru
          _
        %s264 = sand.u32 %s44, 1
        %s265 = scalar_lea.sflag [#allocation3], %s264
        %s266 = sand.u32 %s44, 1
        %s267 = smul.addr %s266, 8
        %s268 = scalar_lea.vmem [#allocation2], %s267
        %p269 = pneg %p57
        %p270 = pneg %p54
        %s271 = sand.u32 %s24, 1
        %s272 = scalar_lea.sflag [#allocation6], %s271
        %s273 = sand.u32 %s70, 1
        %s274 = smul.addr %s273, 8
        %s275 = scalar_lea.vmem [#allocation5], %s274
        %p276 = pneg %p83
        %p277 = pneg %p80
        %p278 = pneg %p109
        %p279 = pneg %p106
        %p280 = pneg %p130
        %p281 = pneg %p127
        %p282 = pneg %p158
        %p283 = pneg %p155
        %s284 = sand.u32 %s145, 1
        %s285 = scalar_lea.sflag [#allocation4], %s284
        %s286 = sand.u32 %s145, 1
        %s287 = smul.addr %s286, 8
        %s288 = scalar_lea.vmem [#allocation8], %s287
        %v289 = vld [vmem:[%s243] sm:$0xff]
        %v290 = vld [vmem:[%s253] sm:$0xff]
        %v291 = vld [vmem:[#allocation7] sm:$0xff]
        %v292 = vld [vmem:[%s3] sm:$0x1]
        %v293 = vperm.slane %v290, 0
        %v294 = vadd.f32 %v293, %v291
        %v295 = vmax.f32 %v294, 0.0
        %v297 = vperm.slane %v292, 0
        %v299 = vmul.f32 %v295, %v297
        %300 = vadd.xlane.f32.xlu0 %v299
        %v301 = vpop.xlane.xlu0 %300
        %v302 = vperm.slane %v290, 1
        %v303 = vadd.f32 %v302, %v291
        %v304 = vmax.f32 %v303, 0.0
        %v305 = vmul.f32 %v304, %v297
        %306 = vadd.xlane.f32.xlu0 %v305
        %v307 = vpop.xlane.xlu0 %306
        %v308 = vperm.slane %v290, 2
        %v309 = vadd.f32 %v308, %v291
        %v310 = vmax.f32 %v309, 0.0
        %v311 = vmul.f32 %v310, %v297
        %312 = vadd.xlane.f32.xlu0 %v311
        %v313 = vpop.xlane.xlu0 %312
        %v314 = vperm.slane %v290, 3
        %v315 = vadd.f32 %v314, %v291
        %v316 = vmax.f32 %v315, 0.0
        %v317 = vmul.f32 %v316, %v297
        %318 = vadd.xlane.f32.xlu0 %v317
        %v319 = vpop.xlane.xlu0 %318
        %v320 = vperm.slane %v290, 4
        %v321 = vadd.f32 %v320, %v291
        %v322 = vmax.f32 %v321, 0.0
        %v323 = vmul.f32 %v322, %v297
        %324 = vadd.xlane.f32.xlu0 %v323
        %v325 = vpop.xlane.xlu0 %324
        %v326 = vperm.slane %v290, 5
        %v327 = vadd.f32 %v326, %v291
        %v328 = vmax.f32 %v327, 0.0
        %v329 = vmul.f32 %v328, %v297
        %330 = vadd.xlane.f32.xlu0 %v329
        %v331 = vpop.xlane.xlu0 %330
        %v332 = vperm.slane %v290, 6
        %v333 = vadd.f32 %v332, %v291
        %v334 = vmax.f32 %v333, 0.0
        %v335 = vmul.f32 %v334, %v297
        %336 = vadd.xlane.f32.xlu0 %v335
        %v337 = vpop.xlane.xlu0 %336
        %v338 = vperm.slane %v290, 7
        %v339 = vadd.f32 %v338, %v291
        %v340 = vmax.f32 %v339, 0.0
        %v341 = vmul.f32 %v340, %v297
        %342 = vadd.xlane.f32.xlu0 %v341
        %v343 = vpop.xlane.xlu0 %342
        %v345 = vlaneseq
        %v346 = vand.u32 %v345, 127
        %v347 = vperm.slane %v301, %v346
        %v350 = vperm.slane %v307, %v346
        %v353 = vperm.slane %v313, %v346
        %v356 = vperm.slane %v319, %v346
        %v359 = vperm.slane %v325, %v346
        %v362 = vperm.slane %v331, %v346
        %v365 = vperm.slane %v337, %v346
        %v368 = vperm.slane %v343, %v346
        %vm370 = vcmask 1040384
        %v371 = vsel %vm370, %v347, %v350
        %vm372 = vcmask 1041408
        %v373 = vsel %vm372, %v371, %v353
        %vm374 = vcmask 1042432
        %v375 = vsel %vm374, %v373, %v356
        %vm376 = vcmask 1043456
        %v377 = vsel %vm376, %v375, %v359
        %vm378 = vcmask 1044480
        %v379 = vsel %vm378, %v377, %v362
        %vm380 = vcmask 1045504
        %v381 = vsel %vm380, %v379, %v365
        %vm382 = vcmask 1046528
        %v383 = vsel %vm382, %v381, %v368
        %vm384 = vcmask 64512
        %v385 = vsel %vm384, %v383, -inf
        %v386 = vrot.slane %v385, 4
        %v387 = vmax.f32 %v385, %v386
        %v388 = vrot.slane %v387, 2
        %v389 = vmax.f32 %v387, %v388
        %v390 = vrot.slane %v389, 1
        %v391 = vmax.f32 %v389, %v390
        %v392 = vsub.f32 %v383, %v391
        %v393 = vmul.f32 %v392, 1.442695
        %v394 = vpow.pop %v393
        %v395 = vsel %vm384, %v394, 0.0
        %v396 = vrot.slane %v395, 4
        %v397 = vadd.f32 %v395, %v396
        %v398 = vrot.slane %v397, 2
        %v399 = vadd.f32 %v397, %v398
        %v400 = vrot.slane %v399, 1
        %v401 = vadd.f32 %v399, %v400
        %v402 = vrcp.pop %v401
        %v403 = vmul.f32 %v394, %v402
        %404 = vxpose.xlu0.b32.start [1/16] %v403, 128
        %405 = vxpose.xlu0.b32.cont [2/16] 0.0, 128
        %406 = vxpose.xlu0.b32.cont [3/16] 0.0, 128
        %407 = vxpose.xlu0.b32.cont [4/16] 0.0, 128
        %408 = vxpose.xlu0.b32.cont [5/16] 0.0, 128
        %409 = vxpose.xlu0.b32.cont [6/16] 0.0, 128
        %410 = vxpose.xlu0.b32.cont [7/16] 0.0, 128
        %411 = vxpose.xlu0.b32.cont [8/16] 0.0, 128
        %412 = vxpose.xlu0.b32.cont [9/16] 0.0, 128
        %413 = vxpose.xlu0.b32.cont [10/16] 0.0, 128
        %414 = vxpose.xlu0.b32.cont [11/16] 0.0, 128
        %415 = vxpose.xlu0.b32.cont [12/16] 0.0, 128
        %416 = vxpose.xlu0.b32.cont [13/16] 0.0, 128
        %417 = vxpose.xlu0.b32.cont [14/16] 0.0, 128
        %418 = vxpose.xlu0.b32.cont [15/16] 0.0, 128
        %419 = vxpose.xlu0.b32.end [16/16] 0.0, 128
        %v420 = vpop.trf.xlu0
        %v421 = vpop.trf.xlu0
        %v422 = vpop.trf.xlu0
        %v423 = vpop.trf.xlu0
        %v424 = vpop.trf.xlu0
        %v425 = vpop.trf.xlu0
        %v426 = vpop.trf.xlu0
        %v427 = vpop.trf.xlu0
        %v428 = vpop.trf.xlu0
        %v429 = vpop.trf.xlu0
        %v430 = vpop.trf.xlu0
        %v431 = vpop.trf.xlu0
        %v432 = vpop.trf.xlu0
        %v433 = vpop.trf.xlu0
        %v434 = vpop.trf.xlu0
        %v435 = vpop.trf.xlu0
        %v437 = vsel %vm384, %v420, 0
        %439 = vmatpush.msra.mxu0 0.0
        %440 = vmatpush.msra.mxu0 0.0
        %441 = vmatpush.msra.mxu0 0.0
        %442 = vmatpush.msra.mxu0 0.0
        %443 = vmatpush.msra.mxu0 0.0
        %444 = vmatpush.msra.mxu0 0.0
        %445 = vmatpush.msra.mxu0 0.0
        %446 = vmatpush.msra.mxu0 0.0
        %447 = vmatpush.msra.mxu0 0.0
        %448 = vmatpush.msra.mxu0 0.0
        %449 = vmatpush.msra.mxu0 0.0
        %450 = vmatpush.msra.mxu0 0.0
        %451 = vmatpush.msra.mxu0 0.0
        %452 = vmatpush.msra.mxu0 0.0
        %453 = vmatpush.msra.mxu0 0.0
        %454 = vmatpush.msra.mxu0 %v289
        %455 = vmatmul.f32.gmra.mxu0 %v437
        %v456 = vpop.f32.mrf.mxu0
        %v457 = vadd.f32 0.0, %v456
        %458 = vdwg.mxu0
        %459 = vst [vmem:[%s288] sm:$0xff] %v457
        %s460 = sand.u32 %s145, 1
        %s461 = scalar_lea.sflag [#allocation4], %s460
        %s462 = sand.u32 %s145, 1
        %s463 = smul.addr %s462, 8
        %s464 = scalar_lea.vmem [#allocation8], %s463
        // Predicated region
        $region49: #{tpu_custom_call.1} parent=35 // pred_check
          %p465 = pneg %p155
        $region50: #{tpu_custom_call.1} parent=35 // pred_check_branch
          %467 = sbr.rel (%p465) target = $region52
        $region51: #{tpu_custom_call.1} parent=35 // pred_region
          %469 = vsyncadd %s461, 0
          %s470 = sadd.s32 %s29, %s28
          %s471 = smul.addr %s470, 8
          %s472 = scalar_lea.hbm %s4, %s471
          %s474 = sshll.u32 %s464, 4
          %s475 = int_to_ptr.vmem [resolvable:$true] %s474
          %s476 = sshll.u32 %s472, 4
          %s477 = int_to_ptr.hbm [resolvable:$true] %s476
          %479 = dma.vmem_to_hbm [thread:$0]  %s475, 128, %s477, %s461
        $region52: #{tpu_custom_call.1} parent=35 // pred_fallthru
          _
      $region36: #{tpu_custom_call.1} parent=5 // pred_fallthru
        _
      %p480 = scmp.le.s32.totalorder 2, %s19
      // Predicated region
      $region53: #{tpu_custom_call.1} parent=5 // pred_check
        %p481 = pneg %p480
      $region54: #{tpu_custom_call.1} parent=5 // pred_check_branch
        %483 = sbr.rel (%p481) target = $region56
      $region55: #{tpu_custom_call.1} parent=5 // pred_region
        %s484 = ssub.s32 %s19, 2
        // Predicated region
        $region57: #{tpu_custom_call.1} parent=55 // pred_check
          %p485 = pneg %p161
        $region58: #{tpu_custom_call.1} parent=55 // pred_check_branch
          %487 = sbr.rel (%p485) target = $region60
        $region59: #{tpu_custom_call.1} parent=55 // pred_region
          %s488 = sand.u32 %s146, 1
          %s489 = scalar_lea.sflag [#allocation4], %s488
          %s490 = sand.u32 %s146, 1
          %s491 = smul.addr %s490, 8
          %s492 = scalar_lea.vmem [#allocation8], %s491
          %494 = dma.done %s489, 128
        $region60: #{tpu_custom_call.1} parent=55 // pred_fallthru
          _
      $region56: #{tpu_custom_call.1} parent=5 // pred_fallthru
        _
    $region6: #{tpu_custom_call.1} parent=1 // loop_footer
      %s23 = sadd.s32 1, %s19
    $region7: #{tpu_custom_call.1} parent=1 // loop_footer_branch
      %18 = sbr.rel target = $region3
    $region8: #{tpu_custom_call.1} parent=1 // loop_exit
      _
    %495 = vsyncpa [#allocation3], 1
    %s496 = scalar_lea.sflag [#allocation3], 1
    %497 = vsyncpa %s496, 1
    %498 = vsyncpa [#allocation6], 1
    %s499 = scalar_lea.sflag [#allocation6], 1
    %500 = vsyncpa %s499, 1
    %501 = vsyncpa [#allocation4], 1
    %s502 = scalar_lea.sflag [#allocation4], 1
    %503 = vsyncpa %s502, 1

</llo_original>
